<compile_context>
chip_gen: v5e
topology: v5e:2x2
jax: 0.10.0
libtpu: 0.0.40
codegen_flags: <defaults>
</compile_context>

<pallas_src>
import math
import functools

import jax
import jax.numpy as jnp
from jax import lax
from jax.experimental import pallas as pl
from jax.experimental.pallas import tpu as pltpu


# -----------------------------------------------------------------------------
# Tiled linear kernel: out = x @ w + b, f32 accumulation over the K grid axis.
# -----------------------------------------------------------------------------
def _linear_kernel(x_ref, w_ref, b_ref, o_ref, acc_ref):
    @pl.when(pl.program_id(2) == 0)
    def _():
        acc_ref[...] = jnp.zeros_like(acc_ref)

    acc_ref[...] += jnp.dot(x_ref[...], w_ref[...],
                            preferred_element_type=jnp.float32)

    @pl.when(pl.program_id(2) == pl.num_programs(2) - 1)
    def _():
        o_ref[...] = (acc_ref[...] + b_ref[...].astype(jnp.float32)
                      ).astype(o_ref.dtype)


def _choose_tile(size, target, multiple):
    """Pick a block size for one axis.

    Returns (tile, padded_size).  Prefers the largest divisor of `size` that is
    <= target and a multiple of `multiple`.  If none exists, the axis is padded
    up to a multiple of the target tile (instead of silently producing a huge
    full-dimension block)."""
    if size <= target:
        return size, size                       # full-extent block is legal
    t = (target // multiple) * multiple
    cand = t
    while cand >= multiple:
        if size % cand == 0:
            return cand, size
        cand -= multiple
    padded = -(-size // t) * t
    return t, padded


def _pad_axis(x, axis, new_size):
    pad = new_size - x.shape[axis]
    if pad == 0:
        return x
    widths = [(0, 0)] * x.ndim
    widths[axis] = (0, pad)
    return jnp.pad(x, widths)


def pallas_linear(x2d, w, b, *, tm=256, tn=256, tk=512):
    """x2d: (M, K), w: (K, N) (torch weight transposed), b: (1, N) -> (M, N).

    Zero padding of non-dividing axes is numerically safe: padded K columns
    contribute 0 to the accumulator, padded M rows / N cols are sliced off."""
    M, K = x2d.shape
    N = w.shape[1]
    tm, Mp = _choose_tile(M, tm, 8)      # sublane axis of x / out blocks
    tk, Kp = _choose_tile(K, tk, 128)    # lane axis of x, sublane axis of w
    tn, Np = _choose_tile(N, tn, 128)    # lane axis of w / out blocks
    if (Mp, Kp) != (M, K):
        x2d = _pad_axis(_pad_axis(x2d, 0, Mp), 1, Kp)
    if (Kp, Np) != (K, N):
        w = _pad_axis(_pad_axis(w, 0, Kp), 1, Np)
    if Np != N:
        b = _pad_axis(b, 1, Np)

    grid = (Mp // tm, Np // tn, Kp // tk)
    out = pl.pallas_call(
        _linear_kernel,
        out_shape=jax.ShapeDtypeStruct((Mp, Np), x2d.dtype),
        grid=grid,
        in_specs=[
            pl.BlockSpec((tm, tk), lambda i, j, kk: (i, kk)),
            pl.BlockSpec((tk, tn), lambda i, j, kk: (kk, j)),
            pl.BlockSpec((1, tn), lambda i, j, kk: (0, j)),
        ],
        out_specs=pl.BlockSpec((tm, tn), lambda i, j, kk: (i, j)),
        scratch_shapes=[pltpu.VMEM((tm, tn), jnp.float32)],
        compiler_params=pltpu.CompilerParams(
            dimension_semantics=("parallel", "parallel", "arbitrary")),
    )(x2d, w, b)
    if (Mp, Np) != (M, N):
        out = out[:M, :N]
    return out


# -----------------------------------------------------------------------------
# Attention kernel: one (batch, head, query-block) per grid step.
# -----------------------------------------------------------------------------
def _attention_kernel(*refs, scale, has_mask):
    if has_mask:
        q_ref, k_ref, v_ref, mask_ref, ctx_ref, w_ref = refs
    else:
        q_ref, k_ref, v_ref, ctx_ref, w_ref = refs
        mask_ref = None

    # Keep operands in their input dtype for the MXU; only softmax math is f32.
    q = q_ref[0, 0] * scale               # (tq, dh)  (scale folded into q)
    k = k_ref[0, 0]                       # (Sk, dh)
    v = v_ref[0, 0]                       # (Sk, dh)

    # Contract the last axes directly (no k.T materialization).
    s = lax.dot_general(q, k, (((1,), (1,)), ((), ())),
                        preferred_element_type=jnp.float32)    # (tq, Sk) f32

    if mask_ref is not None:
        # torch masked_fill(mask, -inf), applied in-kernel.  Note: a fully
        # masked row yields NaN, matching torch softmax(all -inf) semantics.
        s = jnp.where(mask_ref[0, 0] != 0, -jnp.inf, s)

    s = s - jnp.max(s, axis=-1, keepdims=True)
    e = jnp.exp(s)
    # Exact divide: the attention-weight tensor is a module output, so keep
    # rows summing to 1 (no approx reciprocal here).
    p = e / jnp.sum(e, axis=-1, keepdims=True)

    # dropout(p) is identity in eval mode.
    w_ref[0, 0] = p.astype(w_ref.dtype)
    ctx_ref[0, 0] = jnp.dot(p.astype(v.dtype), v,
                            preferred_element_type=jnp.float32
                            ).astype(ctx_ref.dtype)


def pallas_attention(qh, kh, vh, mask=None, *, scale):
    """qh: (B, H, Sq, dh), kh/vh: (B, H, Sk, dh) head-split projections.
    Returns (context (B, H, Sq, dh), attention_weights (B, H, Sq, Sk))."""
    B, H, Sq, dh = qh.shape
    Sk = kh.shape[2]
    has_mask = mask is not None

    # Query-block tiling: per-step VMEM independent of H and ~linear in Sk.
    tq, sq_pad = _choose_tile(Sq, 256, 8)
    if sq_pad != Sq:
        # TODO(synk): pad+mask the query axis for awkward (e.g. prime) Sq.
        tq = Sq

    kernel = functools.partial(_attention_kernel, scale=scale,
                               has_mask=has_mask)

    in_specs = [
        pl.BlockSpec((1, 1, tq, dh), lambda b, h, qi: (b, h, qi, 0)),
        pl.BlockSpec((1, 1, Sk, dh), lambda b, h, qi: (b, h, 0, 0)),
        pl.BlockSpec((1, 1, Sk, dh), lambda b, h, qi: (b, h, 0, 0)),
    ]
    args = [qh, kh, vh]

    if has_mask:
        # Keep the mask compact: only broadcast over batch / heads if it
        # actually depends on them; no (B, H, S, S) f32 bias in HBM.
        mask = jnp.asarray(mask)
        head_dep = mask.ndim >= 3 and mask.shape[-3] == H and H > 1
        batch_dep = mask.ndim >= 4 and mask.shape[-4] == B and B > 1
        Hm = H if head_dep else 1
        Bm = B if batch_dep else 1
        mask_i = jnp.broadcast_to(mask, (Bm, Hm, Sq, Sk)).astype(jnp.int32)
        in_specs.append(pl.BlockSpec(
            (1, 1, tq, Sk),
            lambda b, h, qi: (b if batch_dep else 0,
                              h if head_dep else 0, qi, 0)))
        args.append(mask_i)

    out_specs = (
        pl.BlockSpec((1, 1, tq, dh), lambda b, h, qi: (b, h, qi, 0)),
        pl.BlockSpec((1, 1, tq, Sk), lambda b, h, qi: (b, h, qi, 0)),
    )

    # Explicit VMEM budget (v5e default scoped VMEM is 16 MiB; v7x physical
    # VMEM is 64 MiB) -- double-buffered blocks plus slack for temporaries.
    itemsize = jnp.dtype(qh.dtype).itemsize
    blk = (tq * dh + 2 * Sk * dh) * itemsize          # q, k, v input blocks
    blk += (tq * Sk + tq * dh) * itemsize             # weights + ctx outputs
    if has_mask:
        blk += tq * Sk * 4
    vmem_limit = int(min(max(4 * blk + (2 << 20), 8 << 20), 100 << 20))

    ctx, weights = pl.pallas_call(
        kernel,
        out_shape=(jax.ShapeDtypeStruct((B, H, Sq, dh), qh.dtype),
                   jax.ShapeDtypeStruct((B, H, Sq, Sk), qh.dtype)),
        grid=(B, H, Sq // tq),
        in_specs=in_specs,
        out_specs=out_specs,
        compiler_params=pltpu.CompilerParams(
            dimension_semantics=("parallel", "parallel", "parallel"),
            vmem_limit_bytes=vmem_limit),
    )(*args)
    return ctx, weights


# -----------------------------------------------------------------------------
# Module forward
# -----------------------------------------------------------------------------
def multi_head_attention_forward(q, k, v, params, heads, mask=None):
    """Reproduces MultiHeadAttention.forward (eval-mode dropout == identity)."""
    B, Sq, D = q.shape
    Sk = k.shape[1]
    dh = D // heads
    scale = 1.0 / math.sqrt(dh)

    def split_heads(x2d, seq):
        # (B*seq, D) -> (B, H, seq, dh): lane-dense (rows, dh) per-head tiles.
        return x2d.reshape(B, seq, heads, dh).transpose(0, 2, 1, 3)

    if (q is k) and (q is v):
        # Self-attention: fused QKV projection -- x read from HBM once.
        wq, bq = params["q"]
        wk, bk = params["k"]
        wv, bv = params["v"]
        w_qkv = jnp.concatenate([wq, wk, wv], axis=1)     # (D, 3D)
        b_qkv = jnp.concatenate([bq, bk, bv], axis=1)     # (1, 3D)
        qkv = pallas_linear(q.reshape(B * Sq, D), w_qkv, b_qkv)   # (B*Sq, 3D)
        qh = split_heads(qkv[:, :D], Sq)
        kh = split_heads(qkv[:, D:2 * D], Sq)
        vh = split_heads(qkv[:, 2 * D:], Sq)
    else:
        qh = split_heads(pallas_linear(q.reshape(B * Sq, D), *params["q"]), Sq)
        kh = split_heads(pallas_linear(k.reshape(B * Sk, D), *params["k"]), Sk)
        vh = split_heads(pallas_linear(v.reshape(B * Sk, D), *params["v"]), Sk)

    ctx, attn_weights = pallas_attention(qh, kh, vh, mask, scale=scale)

    # merge heads: (B, H, Sq, dh) -> (B*Sq, D), then output projection.
    ctx = ctx.transpose(0, 2, 1, 3).reshape(B * Sq, D)
    out = pallas_linear(ctx, *params["out"]).reshape(B, Sq, D)
    return out, attn_weights


# -----------------------------------------------------------------------------
# Deterministic parameter init + demo
# -----------------------------------------------------------------------------
def init_params(key, d_model, dtype=jnp.float32):
    names = ["q", "k", "v", "out"]
    params = {}
    keys = jax.random.split(key, 2 * len(names))
    bound = 1.0 / math.sqrt(d_model)
    for i, name in enumerate(names):
        # stored as (Din, Dout) == torch weight (out, in) transposed
        w = jax.random.uniform(keys[2 * i], (d_model, d_model), dtype,
                               minval=-bound, maxval=bound)
        b = jax.random.uniform(keys[2 * i + 1], (1, d_model), dtype,
                               minval=-bound, maxval=bound)
        params[name] = (w, b)
    return params


if __name__ == "__main__":
    heads = 4
    d_model = 32
    batch = 2
    seq = 8

    root = jax.random.PRNGKey(0)
    kq, kk, kv, kp = jax.random.split(root, 4)
    q = jax.random.normal(kq, (batch, seq, d_model), jnp.float32)
    k = jax.random.normal(kk, (batch, seq, d_model), jnp.float32)
    v = jax.random.normal(kv, (batch, seq, d_model), jnp.float32)
    params = init_params(kp, d_model)

    # pure-JAX reference
    def ref_forward(q, k, v, mask=None):
        def lin(x, name):
            w, b = params[name]
            return x @ w + b[0]
        qw, kw, vw = lin(q, "q"), lin(k, "k"), lin(v, "v")

        def split(x):
            return x.reshape(batch, seq, heads,
                             d_model // heads).transpose(0, 2, 1, 3)
        qh, kh, vh = split(qw), split(kw), split(vw)
        s = jnp.einsum("bhqd,bhkd->bhqk", qh, kh) / math.sqrt(d_model // heads)
        if mask is not None:
            s = jnp.where(jnp.broadcast_to(mask, s.shape), -jnp.inf, s)
        p = jax.nn.softmax(s, axis=-1)
        c = jnp.einsum("bhqk,bhkd->bhqd", p, vh)
        c = c.transpose(0, 2, 1, 3).reshape(batch, seq, d_model)
        return lin(c, "out"), p

    atol = rtol = 1e-4

    # --- cross-attention, mask=None ---
    ctx, attn_w = multi_head_attention_forward(q, k, v, params, heads)
    jax.block_until_ready((ctx, attn_w))
    ref_ctx, ref_w = ref_forward(q, k, v)
    assert ctx.shape == (batch, seq, d_model)
    assert attn_w.shape == (batch, heads, seq, seq)
    assert jnp.allclose(ctx, ref_ctx, atol=atol, rtol=rtol)
    assert jnp.allclose(attn_w, ref_w, atol=atol, rtol=rtol)

    # --- boolean causal mask (True above the diagonal is masked) ---
    causal = jnp.triu(jnp.ones((seq, seq), dtype=bool), k=1)
    ctx_m, attn_m = multi_head_attention_forward(q, k, v, params, heads,
                                                 mask=causal)
    jax.block_until_ready((ctx_m, attn_m))
    ref_ctx_m, ref_w_m = ref_forward(q, k, v, mask=causal)
    assert jnp.allclose(ctx_m, ref_ctx_m, atol=atol, rtol=rtol)
    assert jnp.allclose(attn_m, ref_w_m, atol=atol, rtol=rtol)

    # --- self-attention (exercises the fused QKV projection path) ---
    ctx_s, attn_s = multi_head_attention_forward(q, q, q, params, heads,
                                                 mask=causal)
    jax.block_until_ready((ctx_s, attn_s))
    ref_ctx_s, ref_w_s = ref_forward(q, q, q, mask=causal)
    assert jnp.allclose(ctx_s, ref_ctx_s, atol=atol, rtol=rtol)
    assert jnp.allclose(attn_s, ref_w_s, atol=atol, rtol=rtol)

    print("KERNEL_OK")
</pallas_src>

<mosaic_0001>
module attributes {stable_mosaic.version = 11 : i64} {
  func.func @_linear_kernel(%arg0: i32, %arg1: i32, %arg2: i32, %arg3: memref<16x32xf32, #tpu.memory_space<vmem>>, %arg4: memref<32x32xf32, #tpu.memory_space<vmem>>, %arg5: memref<1x32xf32, #tpu.memory_space<vmem>>, %arg6: memref<16x32xf32, #tpu.memory_space<vmem>>, %arg7: memref<16x32xf32, #tpu.memory_space<vmem>>) attributes {dimension_semantics = [#tpu.dimension_semantics<parallel>, #tpu.dimension_semantics<parallel>, #tpu.dimension_semantics<arbitrary>], iteration_bounds = array<i64: 1, 1, 1>, scalar_prefetch = 0 : i64, scratch_operands = 1 : i64, tpu.core_type = #tpu.core_type<tc>, window_params = [{transform_indices = @transform_0, window_bounds = array<i64: 16, 32>}, {transform_indices = @transform_1, window_bounds = array<i64: 32, 32>}, {transform_indices = @transform_2, window_bounds = array<i64: 1, 32>}, {transform_indices = @transform_3, window_bounds = array<i64: 16, 32>}]} {
    %c0_i32 = arith.constant 0 : i32
    %0 = arith.cmpi eq, %arg2, %c0_i32 : i32
    %1 = arith.extui %0 : i1 to i32
    %c0_i32_0 = arith.constant 0 : i32
    %2 = arith.cmpi ne, %1, %c0_i32_0 : i32
    scf.if %2 {
      %cst_10 = arith.constant 0.000000e+00 : f32
      %12 = vector.broadcast %cst_10 : f32 to vector<16x32xf32>
      %c0_11 = arith.constant 0 : index
      %c0_12 = arith.constant 0 : index
      %13 = vector.load %arg7[%c0_11, %c0_12] : memref<16x32xf32, #tpu.memory_space<vmem>>, vector<16x32xf32>
      tpu.vector_store %arg7[%c0_11, %c0_12], %12 {strides = array<i32>} : memref<16x32xf32, #tpu.memory_space<vmem>>, vector<16x32xf32>,
    } else {
    }
    %c0 = arith.constant 0 : index
    %c0_1 = arith.constant 0 : index
    %3 = vector.load %arg7[%c0, %c0_1] : memref<16x32xf32, #tpu.memory_space<vmem>>, vector<16x32xf32>
    %c0_2 = arith.constant 0 : index
    %c0_3 = arith.constant 0 : index
    %4 = vector.load %arg3[%c0_2, %c0_3] : memref<16x32xf32, #tpu.memory_space<vmem>>, vector<16x32xf32>
    %c0_4 = arith.constant 0 : index
    %c0_5 = arith.constant 0 : index
    %5 = vector.load %arg4[%c0_4, %c0_5] : memref<32x32xf32, #tpu.memory_space<vmem>>, vector<32x32xf32>
    %cst = arith.constant dense<0.000000e+00> : vector<16x32xf32>
    %6 = tpu.matmul %4, %5, %cst {dimension_numbers = #tpu.dot_dimension_numbers<[1], [0], [0], [1], [0, 0, 1, 1], [], []>} : vector<16x32xf32>, vector<32x32xf32>, vector<16x32xf32> -> vector<16x32xf32>
    %7 = arith.addf %3, %6 : vector<16x32xf32>
    %c0_6 = arith.constant 0 : index
    %c0_7 = arith.constant 0 : index
    %8 = vector.load %arg7[%c0_6, %c0_7] : memref<16x32xf32, #tpu.memory_space<vmem>>, vector<16x32xf32>
    tpu.vector_store %arg7[%c0_6, %c0_7], %7 {strides = array<i32>} : memref<16x32xf32, #tpu.memory_space<vmem>>, vector<16x32xf32>,
    %c0_i32_8 = arith.constant 0 : i32
    %9 = arith.cmpi eq, %arg2, %c0_i32_8 : i32
    %10 = arith.extui %9 : i1 to i32
    %c0_i32_9 = arith.constant 0 : i32
    %11 = arith.cmpi ne, %10, %c0_i32_9 : i32
    scf.if %11 {
      %c0_10 = arith.constant 0 : index
      %c0_11 = arith.constant 0 : index
      %12 = vector.load %arg7[%c0_10, %c0_11] : memref<16x32xf32, #tpu.memory_space<vmem>>, vector<16x32xf32>
      %c0_12 = arith.constant 0 : index
      %c0_13 = arith.constant 0 : index
      %13 = vector.load %arg5[%c0_12, %c0_13] : memref<1x32xf32, #tpu.memory_space<vmem>>, vector<1x32xf32>
      %14 = vector.broadcast %13 : vector<1x32xf32> to vector<16x32xf32>
      %15 = arith.addf %12, %14 : vector<16x32xf32>
      %c0_14 = arith.constant 0 : index
      %c0_15 = arith.constant 0 : index
      %16 = vector.load %arg6[%c0_14, %c0_15] : memref<16x32xf32, #tpu.memory_space<vmem>>, vector<16x32xf32>
      tpu.vector_store %arg6[%c0_14, %c0_15], %15 {strides = array<i32>} : memref<16x32xf32, #tpu.memory_space<vmem>>, vector<16x32xf32>,
    } else {
    }
    return
  }
  func.func @transform_0(%arg0: i32, %arg1: i32, %arg2: i32) -> (i32, i32) {
    %c0_i32 = arith.constant 0 : i32
    return %arg0, %arg2 : i32, i32
  }
  func.func @transform_1(%arg0: i32, %arg1: i32, %arg2: i32) -> (i32, i32) {
    %c0_i32 = arith.constant 0 : i32
    return %arg2, %arg1 : i32, i32
  }
  func.func @transform_2(%arg0: i32, %arg1: i32, %arg2: i32) -> (i32, i32) {
    %c0_i32 = arith.constant 0 : i32
    %c0_i32_0 = arith.constant 0 : i32
    return %c0_i32, %arg1 : i32, i32
  }
  func.func @transform_3(%arg0: i32, %arg1: i32, %arg2: i32) -> (i32, i32) {
    %c0_i32 = arith.constant 0 : i32
    return %arg0, %arg1 : i32, i32
  }
}

</mosaic_0001>

<llo_original>
// kernel: tpu_custom_call.1
$region0: #{tpu_custom_call.1}
  #allocation0 [shape = 'u32[]', space=smem, size = 0x4, offset = 0x4, fixed_abs, tag = 'smem constant byte address 0x4 - core index']
  #allocation1 [shape = 'u32[72,128]{1,0:T(1,128)}', space=vmem, size = 0x9000, scoped, tag = 'internal scratch']
  #allocation2 [shape = 'f32[16,32]{1,0:T(8,128)}', space=vmem, size = 0x2000, scoped, tag = 'scratch operand']
  %s0 = inlined_call_operand.hbm [shape: f32[16,32], index: 0, kind: input, shape index: {}]
  %s1 = inlined_call_operand.hbm [shape: f32[32,32], index: 1, kind: input, shape index: {}]
  %s2 = inlined_call_operand.vmem [shape: f32[1,32], index: 2, kind: input, shape index: {}]
  %s3 = inlined_call_operand.hbm [shape: f32[16,32], index: 3, kind: output, shape index: {}]
  %s4 = sld [smem:[#allocation0]]
  $region38: #{tpu_custom_call.1} parent=0
    _
  %s6 = ssub.s32 1, %s4
  %s7 = scalar_select 0, %s6, %s4
  $region1: #{tpu_custom_call.1} parent=0
    #allocation3 [shape = 'u8[8192]{0}', space=vmem, size = 0x2000, scoped, tag = 'input window, operand 0, single buffered']
    #allocation4 [shape = 's32[1]{0}', space=sflag, size = 0x4, scoped, tag = 'scoped memory for tpu_custom_call.1']
    #allocation5 [shape = 's32[1]{0}', space=sflag, size = 0x4, scoped, tag = 'scoped memory for tpu_custom_call.1']
    #allocation6 [shape = 'u8[16384]{0}', space=vmem, size = 0x4000, scoped, tag = 'input window, operand 1, single buffered']
    #allocation7 [shape = 's32[1]{0}', space=sflag, size = 0x4, scoped, tag = 'scoped memory for tpu_custom_call.1']
    #allocation8 [shape = 'u8[8192]{0}', space=vmem, size = 0x2000, scoped, tag = 'output window, operand 0, single buffered']
    %8 = vsyncpa [#allocation4], 0
    %9 = vsyncpa [#allocation7], 0
    %10 = vsyncpa [#allocation5], 0
    // Predicated region
    $region2: #{tpu_custom_call.1} parent=1 // pred_check
      _
    $region3: #{tpu_custom_call.1} parent=1 // pred_check_branch
      %12 = sbr.rel (0) target = $region5
    $region4: #{tpu_custom_call.1} parent=1 // pred_region
      %14 = vsyncadd [#allocation4], 0
      %s15 = sshll.u32 %s0, 4
      %s16 = int_to_ptr.hbm [resolvable:$true] %s15
      %s17 = sshll.u32 [#allocation3], 4
      %s18 = int_to_ptr.vmem [resolvable:$true] %s17
      %23 = dma.hbm_to_vmem [thread:$0]  %s16, 256, %s18, [#allocation4], 128, 128, 8
    $region5: #{tpu_custom_call.1} parent=1 // pred_fallthru
      _
    // Predicated region
    $region6: #{tpu_custom_call.1} parent=1 // pred_check
      _
    $region7: #{tpu_custom_call.1} parent=1 // pred_check_branch
      %25 = sbr.rel (0) target = $region9
    $region8: #{tpu_custom_call.1} parent=1 // pred_region
      %27 = vsyncadd [#allocation7], 0
      %s28 = sshll.u32 %s1, 4
      %s29 = int_to_ptr.hbm [resolvable:$true] %s28
      %s30 = sshll.u32 [#allocation6], 4
      %s31 = int_to_ptr.vmem [resolvable:$true] %s30
      %36 = dma.hbm_to_vmem [thread:$0]  %s29, 512, %s31, [#allocation7], 128, 128, 8
    $region9: #{tpu_custom_call.1} parent=1 // pred_fallthru
      _
    // Predicated region
    $region10: #{tpu_custom_call.1} parent=1 // pred_check
      _
    $region11: #{tpu_custom_call.1} parent=1 // pred_check_branch
      %38 = sbr.rel (0) target = $region13
    $region12: #{tpu_custom_call.1} parent=1 // pred_region
      _
    $region13: #{tpu_custom_call.1} parent=1 // pred_fallthru
      _
    // Predicated region
    $region14: #{tpu_custom_call.1} parent=1 // pred_check
      _
    $region15: #{tpu_custom_call.1} parent=1 // pred_check_branch
      %40 = sbr.rel (0) target = $region17
    $region16: #{tpu_custom_call.1} parent=1 // pred_region
      %42 = dma.done [#allocation4], 256
    $region17: #{tpu_custom_call.1} parent=1 // pred_fallthru
      _
    // Predicated region
    $region18: #{tpu_custom_call.1} parent=1 // pred_check
      _
    $region19: #{tpu_custom_call.1} parent=1 // pred_check_branch
      %44 = sbr.rel (0) target = $region21
    $region20: #{tpu_custom_call.1} parent=1 // pred_region
      %46 = dma.done [#allocation7], 512
    $region21: #{tpu_custom_call.1} parent=1 // pred_fallthru
      _
    %p47 = scmp.eq.s32.totalorder 0, 0
    // Predicated region
    $region22: #{tpu_custom_call.1} parent=1 // pred_check
      %p48 = pneg %p47
    $region23: #{tpu_custom_call.1} parent=1 // pred_check_branch
      %50 = sbr.rel (%p48) target = $region25
    $region24: #{tpu_custom_call.1} parent=1 // pred_region
      %vm51 = vcmask 261120
      %52 = vst.msk [vmem:[#allocation2] sm:$0xff] %vm51, 0.0
      %53 = vst.msk [vmem:[#allocation2 + $0x8] sm:$0xff] %vm51, 0.0
    $region25: #{tpu_custom_call.1} parent=1 // pred_fallthru
      _
    %v54 = vld [vmem:[#allocation2] sm:$0xff]
    %v55 = vld [vmem:[#allocation2 + $0x8] sm:$0xff]
    %v56 = vld [vmem:[#allocation3] sm:$0xff]
    %v57 = vld [vmem:[#allocation3 + $0x8] sm:$0xff]
    %v58 = vld [vmem:[#allocation6] sm:$0xff]
    %v59 = vld [vmem:[#allocation6 + $0x8] sm:$0xff]
    %v60 = vld [vmem:[#allocation6 + $0x10] sm:$0xff]
    %v61 = vld [vmem:[#allocation6 + $0x18] sm:$0xff]
    %vm62 = vcmask 261120
    %v64 = vsel %vm62, %v56, 0
    %v67 = vsel %vm62, %v57, 0
    %69 = vmatpush.msra.mxu0 0.0
    %70 = vmatpush.msra.mxu0 0.0
    %71 = vmatpush.msra.mxu0 0.0
    %72 = vmatpush.msra.mxu0 0.0
    %73 = vmatpush.msra.mxu0 0.0
    %74 = vmatpush.msra.mxu0 0.0
    %75 = vmatpush.msra.mxu0 0.0
    %76 = vmatpush.msra.mxu0 0.0
    %77 = vmatpush.msra.mxu0 0.0
    %78 = vmatpush.msra.mxu0 0.0
    %79 = vmatpush.msra.mxu0 0.0
    %80 = vmatpush.msra.mxu0 0.0
    %81 = vmatpush.msra.mxu0 %v61
    %82 = vmatpush.msra.mxu0 %v60
    %83 = vmatpush.msra.mxu0 %v59
    %84 = vmatpush.msra.mxu0 %v58
    %85 = vmatmul.f32.gmra.mxu0 %v64
    %v86 = vpop.f32.mrf.mxu0
    %v87 = vadd.f32 0.0, %v86
    %88 = vmatmul.f32.gmra.mxu0 %v67
    %v89 = vpop.f32.mrf.mxu0
    %v90 = vadd.f32 0.0, %v89
    %91 = vdwg.mxu0
    %v92 = vadd.f32 %v54, %v87
    %v93 = vadd.f32 %v55, %v90
    %94 = vst.msk [vmem:[#allocation2] sm:$0xff] %vm62, %v92
    %95 = vst.msk [vmem:[#allocation2 + $0x8] sm:$0xff] %vm62, %v93
    // Predicated region
    $region26: #{tpu_custom_call.1} parent=1 // pred_check
      %p96 = pneg %p47
    $region27: #{tpu_custom_call.1} parent=1 // pred_check_branch
      %98 = sbr.rel (%p96) target = $region29
    $region28: #{tpu_custom_call.1} parent=1 // pred_region
      %v99 = vld [vmem:[#allocation2] sm:$0xff]
      %v100 = vld [vmem:[#allocation2 + $0x8] sm:$0xff]
      %v101 = vld [vmem:[%s2] sm:$0x1]
      %v103 = vperm.slane %v101, 0
      %v105 = vadd.f32 %v99, %v103
      %v106 = vadd.f32 %v100, %v103
      %107 = vst.msk [vmem:[#allocation8] sm:$0xff] %vm62, %v105
      %108 = vst.msk [vmem:[#allocation8 + $0x8] sm:$0xff] %vm62, %v106
    $region29: #{tpu_custom_call.1} parent=1 // pred_fallthru
      _
    // Predicated region
    $region30: #{tpu_custom_call.1} parent=1 // pred_check
      _
    $region31: #{tpu_custom_call.1} parent=1 // pred_check_branch
      %110 = sbr.rel (0) target = $region33
    $region32: #{tpu_custom_call.1} parent=1 // pred_region
      %112 = vsyncadd [#allocation5], 0
      %s113 = sshll.u32 [#allocation8], 4
      %s114 = int_to_ptr.vmem [resolvable:$true] %s113
      %s115 = sshll.u32 %s3, 4
      %s116 = int_to_ptr.hbm [resolvable:$true] %s115
      %121 = dma.vmem_to_hbm [thread:$0]  %s114, 256, %s116, [#allocation5], 128, 128, 8
    $region33: #{tpu_custom_call.1} parent=1 // pred_fallthru
      _
    // Predicated region
    $region34: #{tpu_custom_call.1} parent=1 // pred_check
      _
    $region35: #{tpu_custom_call.1} parent=1 // pred_check_branch
      %123 = sbr.rel (0) target = $region37
    $region36: #{tpu_custom_call.1} parent=1 // pred_region
      %125 = dma.done [#allocation5], 256
    $region37: #{tpu_custom_call.1} parent=1 // pred_fallthru
      _
    %126 = vsyncpa [#allocation4], 1
    %127 = vsyncpa [#allocation7], 1
    %128 = vsyncpa [#allocation5], 1

</llo_original>
